<compile_context>
chip_gen: v6e
topology: v6e:2x2x1
jax: 0.10.0
libtpu: 0.0.40
codegen_flags: <defaults>
</compile_context>

<pallas_src>
import jax
import jax.numpy as jnp
from jax.experimental import pallas as pl
from jax.experimental.pallas import tpu as pltpu


def _round_up(x: int, m: int) -> int:
    return ((x + m - 1) // m) * m


def _tpu_generation() -> int:
    """Best-effort TPU generation from device_kind; defaults to 6 (MXU/bf16 path)."""
    try:
        kind = jax.devices()[0].device_kind.lower()
    except Exception:
        return 6
    for g in (7, 6, 5, 4):
        if f"v{g}" in kind:
            return g
    return 6


def _make_critic_kernel(use_mxu_fc3: bool, elem_bf16: bool, fc1_bf16: bool):
    """Feature-major critic kernel.

    x_ref  : (8, TB)    cat([state, action]) features on sublanes, batch on lanes
    w1_ref : (256, 8)   W1^T (f32)
    b1_ref : (256, 1)
    w2_ref : (256, 256) W2^T (bf16 MXU operand)
    b2_ref : (256, 1)
    w3_ref : (1, 256) if use_mxu_fc3 else (256, 1)
    b3_ref : (1, 1)     SMEM scalar
    out_ref: (1, TB)    lane-dense q row
    """
    def kernel(x_ref, w1_ref, b1_ref, w2_ref, b2_ref, w3_ref, b3_ref, out_ref):
        x = x_ref[...]
        w1 = w1_ref[...]
        if fc1_bf16:  # v5e is MXU-bound: avoid f32 multi-pass on fc1 too.
            x = x.astype(jnp.bfloat16)
            w1 = w1.astype(jnp.bfloat16)

        # fc1: (256,8) @ (8,TB) -> (256,TB), f32 accumulation.
        h1 = jnp.dot(w1, x, preferred_element_type=jnp.float32)
        if elem_bf16:   # v6e/v7x: packed-bf16 VALU halves bias/relu op count.
            h1 = jnp.maximum(h1.astype(jnp.bfloat16)
                             + b1_ref[...].astype(jnp.bfloat16), 0)
        else:           # v5e: no bf16 VALU -> keep elementwise in f32.
            h1 = jnp.maximum(h1 + b1_ref[...], 0.0).astype(jnp.bfloat16)

        # fc2 (dominant): (256,256) bf16 @ (256,TB) bf16 -> f32 accumulation.
        h2 = jnp.dot(w2_ref[...], h1, preferred_element_type=jnp.float32)
        if elem_bf16:
            h2 = jnp.maximum(h2.astype(jnp.bfloat16)
                             + b2_ref[...].astype(jnp.bfloat16), 0)
        else:
            h2 = jnp.maximum(h2 + b2_ref[...], 0.0)

        # fc3 (256 -> 1):
        #   v6e/v7x: MXU has slack -> (1,256) @ (256,TB) dot (removes ~380 VALU
        #            ops + the cross-feature reduce from the saturated slot).
        #   v5e:     MXU is the binding slot -> VPU multiply + sublane reduce.
        if use_mxu_fc3:
            q = jnp.dot(w3_ref[...].astype(h2.dtype), h2,
                        preferred_element_type=jnp.float32)          # (1, TB)
        else:
            q = jnp.sum(h2 * w3_ref[...], axis=0, keepdims=True)     # (1, TB)

        out_ref[...] = (q + b3_ref[0, 0]).astype(out_ref.dtype)

    return kernel


def critic_forward(state, action, packed_params, *, block_b=2048):
    """state: (B, 6), action: (B, 2) -> q_value: (B, 1) float32."""
    w1t, b1, w2t, b2, w3_row, w3_col, b3 = packed_params
    state = state.astype(jnp.float32)
    action = action.astype(jnp.float32)
    B = state.shape[0]

    gen = _tpu_generation()
    use_mxu_fc3 = gen >= 6
    elem_bf16 = gen >= 6
    fc1_bf16 = gen <= 5

    # Batch tile (lane axis): multiple of 128. Large default amortizes the
    # ~0.35us per-grid-step overhead; split into >=2 tiles when possible so the
    # "parallel" batch axis shards across both TensorCores on v7x.
    B128 = _round_up(B, 128)
    TB = min(_round_up(max(block_b, 128), 128), B128)
    if B128 > 128:
        TB = min(TB, _round_up(pl.cdiv(B128, 2), 128))
    Bp = _round_up(B, TB)
    num_tiles = Bp // TB

    # Merged, feature-major input: cat([state, action], 1)^T -> (8, Bp).
    # Batch on lanes => contiguous input DMAs and a lane-dense output store.
    x = jnp.concatenate([state, action], axis=1)          # (B, 8)
    if Bp != B:
        x = jnp.pad(x, ((0, Bp - B), (0, 0)))
    x = x.T                                               # (8, Bp)

    w3 = w3_row if use_mxu_fc3 else w3_col

    flops = 2 * Bp * (8 * 256 + 256 * 256 + 256)
    bytes_accessed = (Bp * 8 * 4 + Bp * 4
                      + w1t.size * 4 + b1.size * 4
                      + w2t.size * 2 + b2.size * 4
                      + w3.size * 4 + b3.size * 4)

    kernel = _make_critic_kernel(use_mxu_fc3, elem_bf16, fc1_bf16)

    out = pl.pallas_call(
        kernel,
        out_shape=jax.ShapeDtypeStruct((1, Bp), jnp.float32),
        grid=(num_tiles,),
        in_specs=[
            pl.BlockSpec((8, TB), lambda i: (0, i)),            # x tile (pipelined)
            pl.BlockSpec((256, 8), lambda i: (0, 0)),           # W1^T      (resident)
            pl.BlockSpec((256, 1), lambda i: (0, 0)),           # b1        (resident)
            pl.BlockSpec((256, 256), lambda i: (0, 0)),         # W2^T bf16 (resident)
            pl.BlockSpec((256, 1), lambda i: (0, 0)),           # b2        (resident)
            pl.BlockSpec(w3.shape, lambda i: (0, 0)),           # W3        (resident)
            pl.BlockSpec(memory_space=pltpu.MemorySpace.SMEM),  # b3 scalar
        ],
        out_specs=pl.BlockSpec((1, TB), lambda i: (0, i)),      # lane-dense q row
        compiler_params=pltpu.CompilerParams(
            dimension_semantics=("parallel",),                  # megacore on v7x
            vmem_limit_bytes=(32 * 1024 * 1024 if TB >= 2048 else None),
        ),
        cost_estimate=pl.CostEstimate(
            flops=flops, transcendentals=0, bytes_accessed=bytes_accessed),
    )(x, w1t, b1, w2t, b2, w3, b3)

    return out[0, :B].reshape(B, 1)


def init_critic_params(key):
    """Matches nn.Linear default init: U(-1/sqrt(fan_in), 1/sqrt(fan_in)).
    Weights stored transposed relative to PyTorch: shape (in, out), f32."""
    def linear(key, fan_in, fan_out):
        kw, kb = jax.random.split(key)
        bound = 1.0 / jnp.sqrt(fan_in)
        w = jax.random.uniform(kw, (fan_in, fan_out), jnp.float32, -bound, bound)
        b = jax.random.uniform(kb, (1, fan_out), jnp.float32, -bound, bound)
        return w, b

    k1, k2, k3 = jax.random.split(key, 3)
    w1, b1 = linear(k1, 8, 256)
    w2, b2 = linear(k2, 256, 256)
    w3, b3 = linear(k3, 256, 1)
    return (w1, b1, w2, b2, w3, b3)


def pack_critic_params(params):
    """Convert f32 (in,out) params into the feature-major kernel layout."""
    w1, b1, w2, b2, w3, b3 = params
    return (
        jnp.asarray(w1.T, jnp.float32),           # (256, 8)   W1^T
        b1.reshape(256, 1).astype(jnp.float32),   # (256, 1)
        jnp.asarray(w2.T, jnp.bfloat16),          # (256, 256) W2^T bf16 MXU operand
        b2.reshape(256, 1).astype(jnp.float32),   # (256, 1)
        w3.reshape(1, 256).astype(jnp.float32),   # (1, 256)   row form  (MXU fc3)
        w3.reshape(256, 1).astype(jnp.float32),   # (256, 1)   col form  (VPU fc3, v5e)
        b3.reshape(1, 1).astype(jnp.float32),     # (1, 1) -> SMEM scalar
    )


if __name__ == "__main__":
    key = jax.random.PRNGKey(0)
    kp, ks, ka = jax.random.split(key, 3)

    params = init_critic_params(kp)
    packed = pack_critic_params(params)

    B = 4
    state = jax.random.normal(ks, (B, 6), jnp.float32)
    action = jax.random.normal(ka, (B, 2), jnp.float32)

    q = critic_forward(state, action, packed)
    q = jax.block_until_ready(q)

    # Pure-JAX f32 reference (same math as the PyTorch module).
    w1, b1, w2, b2, w3, b3 = params
    xx = jnp.concatenate([state, action], axis=1)
    h1 = jnp.maximum(xx @ w1 + b1, 0.0)
    h2 = jnp.maximum(h1 @ w2 + b2, 0.0)
    q_ref = h2 @ w3 + b3

    assert q.shape == (B, 1)
    assert bool(jnp.all(jnp.isfinite(q)))
    # fc2 (and on v6e/v7x the bias/relu + fc3) run with bf16 operands
    # (f32 accumulation) -> tolerance loosened vs the pure-f32 reference.
    assert jnp.allclose(q, q_ref, atol=5e-2, rtol=5e-2), (q, q_ref)

    print("KERNEL_OK")
</pallas_src>

<mosaic_0001>
module attributes {stable_mosaic.version = 11 : i64} {
  func.func @kernel(%arg0: i32, %arg1: memref<8x128xf32, #tpu.memory_space<vmem>>, %arg2: memref<256x8xf32, #tpu.memory_space<vmem>>, %arg3: memref<256x1xf32, #tpu.memory_space<vmem>>, %arg4: memref<256x256xbf16, #tpu.memory_space<vmem>>, %arg5: memref<256x1xf32, #tpu.memory_space<vmem>>, %arg6: memref<1x256xf32, #tpu.memory_space<vmem>>, %arg7: memref<1x1xf32, #tpu.memory_space<smem>>, %arg8: memref<1x128xf32, #tpu.memory_space<vmem>>) attributes {dimension_semantics = [#tpu.dimension_semantics<parallel>], iteration_bounds = array<i64: 1>, scalar_prefetch = 0 : i64, scratch_operands = 0 : i64, tpu.core_type = #tpu.core_type<tc>, window_params = [{transform_indices = @transform_0, window_bounds = array<i64: 8, 128>}, {pipeline_mode = #tpu.pipeline_mode<synchronous>, transform_indices = @transform_1, window_bounds = array<i64: 256, 8>}, {pipeline_mode = #tpu.pipeline_mode<synchronous>, transform_indices = @transform_2, window_bounds = array<i64: 256, 1>}, {pipeline_mode = #tpu.pipeline_mode<synchronous>, transform_indices = @transform_3, window_bounds = array<i64: 256, 256>}, {pipeline_mode = #tpu.pipeline_mode<synchronous>, transform_indices = @transform_4, window_bounds = array<i64: 256, 1>}, {pipeline_mode = #tpu.pipeline_mode<synchronous>, transform_indices = @transform_5, window_bounds = array<i64: 1, 256>}, {transform_indices = @transform_6, window_bounds = array<i64: 1, 1>}, {transform_indices = @transform_7, window_bounds = array<i64: 1, 128>}]} {
    %c0 = arith.constant 0 : index
    %c0_0 = arith.constant 0 : index
    %0 = vector.load %arg1[%c0, %c0_0] : memref<8x128xf32, #tpu.memory_space<vmem>>, vector<8x128xf32>
    %c0_1 = arith.constant 0 : index
    %c0_2 = arith.constant 0 : index
    %1 = vector.load %arg2[%c0_1, %c0_2] : memref<256x8xf32, #tpu.memory_space<vmem>>, vector<256x8xf32>
    %cst = arith.constant dense<0.000000e+00> : vector<256x128xf32>
    %2 = tpu.matmul %1, %0, %cst {dimension_numbers = #tpu.dot_dimension_numbers<[1], [0], [0], [1], [0, 0, 1, 1], [], []>} : vector<256x8xf32>, vector<8x128xf32>, vector<256x128xf32> -> vector<256x128xf32>
    %3 = arith.truncf %2 : vector<256x128xf32> to vector<256x128xbf16>
    %c0_3 = arith.constant 0 : index
    %c0_4 = arith.constant 0 : index
    %4 = vector.load %arg3[%c0_3, %c0_4] : memref<256x1xf32, #tpu.memory_space<vmem>>, vector<256x1xf32>
    %5 = arith.truncf %4 : vector<256x1xf32> to vector<256x1xbf16>
    %6 = vector.broadcast %5 : vector<256x1xbf16> to vector<256x128xbf16>
    %7 = arith.addf %3, %6 : vector<256x128xbf16>
    %cst_5 = arith.constant 0.000000e+00 : bf16
    %8 = vector.broadcast %cst_5 : bf16 to vector<256x128xbf16>
    %9 = arith.maximumf %7, %8 : vector<256x128xbf16>
    %c0_6 = arith.constant 0 : index
    %c0_7 = arith.constant 0 : index
    %10 = vector.load %arg4[%c0_6, %c0_7] : memref<256x256xbf16, #tpu.memory_space<vmem>>, vector<256x256xbf16>
    %cst_8 = arith.constant dense<0.000000e+00> : vector<256x128xf32>
    %11 = tpu.matmul %10, %9, %cst_8 {dimension_numbers = #tpu.dot_dimension_numbers<[1], [0], [0], [1], [0, 0, 1, 1], [], []>} : vector<256x256xbf16>, vector<256x128xbf16>, vector<256x128xf32> -> vector<256x128xf32>
    %12 = arith.truncf %11 : vector<256x128xf32> to vector<256x128xbf16>
    %c0_9 = arith.constant 0 : index
    %c0_10 = arith.constant 0 : index
    %13 = vector.load %arg5[%c0_9, %c0_10] : memref<256x1xf32, #tpu.memory_space<vmem>>, vector<256x1xf32>
    %14 = arith.truncf %13 : vector<256x1xf32> to vector<256x1xbf16>
    %15 = vector.broadcast %14 : vector<256x1xbf16> to vector<256x128xbf16>
    %16 = arith.addf %12, %15 : vector<256x128xbf16>
    %cst_11 = arith.constant 0.000000e+00 : bf16
    %17 = vector.broadcast %cst_11 : bf16 to vector<256x128xbf16>
    %18 = arith.maximumf %16, %17 : vector<256x128xbf16>
    %c0_12 = arith.constant 0 : index
    %c0_13 = arith.constant 0 : index
    %19 = vector.load %arg6[%c0_12, %c0_13] : memref<1x256xf32, #tpu.memory_space<vmem>>, vector<1x256xf32>
    %20 = arith.truncf %19 : vector<1x256xf32> to vector<1x256xbf16>
    %cst_14 = arith.constant dense<0.000000e+00> : vector<1x128xf32>
    %21 = tpu.matmul %20, %18, %cst_14 {dimension_numbers = #tpu.dot_dimension_numbers<[1], [0], [0], [1], [0, 0, 1, 1], [], []>} : vector<1x256xbf16>, vector<256x128xbf16>, vector<1x128xf32> -> vector<1x128xf32>
    %c0_15 = arith.constant 0 : index
    %c0_16 = arith.constant 0 : index
    %22 = memref.load %arg7[%c0_15, %c0_16] : memref<1x1xf32, #tpu.memory_space<smem>>
    %23 = vector.broadcast %22 : f32 to vector<1x128xf32>
    %24 = arith.addf %21, %23 : vector<1x128xf32>
    %c0_17 = arith.constant 0 : index
    %c0_18 = arith.constant 0 : index
    %25 = vector.load %arg8[%c0_17, %c0_18] : memref<1x128xf32, #tpu.memory_space<vmem>>, vector<1x128xf32>
    tpu.vector_store %arg8[%c0_17, %c0_18], %24 {strides = array<i32>} : memref<1x128xf32, #tpu.memory_space<vmem>>, vector<1x128xf32>,
    return
  }
  func.func @transform_0(%arg0: i32) -> (i32, i32) {
    %c0_i32 = arith.constant 0 : i32
    %c0_i32_0 = arith.constant 0 : i32
    return %c0_i32, %arg0 : i32, i32
  }
  func.func @transform_1(%arg0: i32) -> (i32, i32) {
    %c0_i32 = arith.constant 0 : i32
    %c0_i32_0 = arith.constant 0 : i32
    %c0_i32_1 = arith.constant 0 : i32
    return %c0_i32, %c0_i32_0 : i32, i32
  }
  func.func @transform_2(%arg0: i32) -> (i32, i32) {
    %c0_i32 = arith.constant 0 : i32
    %c0_i32_0 = arith.constant 0 : i32
    %c0_i32_1 = arith.constant 0 : i32
    return %c0_i32, %c0_i32_0 : i32, i32
  }
  func.func @transform_3(%arg0: i32) -> (i32, i32) {
    %c0_i32 = arith.constant 0 : i32
    %c0_i32_0 = arith.constant 0 : i32
    %c0_i32_1 = arith.constant 0 : i32
    return %c0_i32, %c0_i32_0 : i32, i32
  }
  func.func @transform_4(%arg0: i32) -> (i32, i32) {
    %c0_i32 = arith.constant 0 : i32
    %c0_i32_0 = arith.constant 0 : i32
    %c0_i32_1 = arith.constant 0 : i32
    return %c0_i32, %c0_i32_0 : i32, i32
  }
  func.func @transform_5(%arg0: i32) -> (i32, i32) {
    %c0_i32 = arith.constant 0 : i32
    %c0_i32_0 = arith.constant 0 : i32
    %c0_i32_1 = arith.constant 0 : i32
    return %c0_i32, %c0_i32_0 : i32, i32
  }
  func.func @transform_6(%arg0: i32) -> (i32, i32) {
    %c0_i32 = arith.constant 0 : i32
    %c0_i32_0 = arith.constant 0 : i32
    %c0_i32_1 = arith.constant 0 : i32
    return %c0_i32, %c0_i32_0 : i32, i32
  }
  func.func @transform_7(%arg0: i32) -> (i32, i32) {
    %c0_i32 = arith.constant 0 : i32
    %c0_i32_0 = arith.constant 0 : i32
    return %c0_i32, %arg0 : i32, i32
  }
}

</mosaic_0001>

<llo_original>
// kernel: tpu_custom_call.1
$region0: #{tpu_custom_call.1}
  #allocation0 [shape = 'u32[]', space=smem, size = 0x4, offset = 0x4, fixed_abs, tag = 'smem constant byte address 0x4 - core index']
  #allocation1 [shape = 'u32[144,128]{1,0:T(1,128)}', space=vmem, size = 0x12000, scoped, tag = 'internal scratch']
  #allocation2 [shape = 'f32[1,1]{1,0:T(1,128)S(6)}', space=smem, size = 0x200, scoped, tag = 'scoped memory for tpu_custom_call.1']
  %s0 = inlined_call_operand.vmem [shape: f32[8,128], index: 0, kind: input, shape index: {}]
  %s1 = inlined_call_operand.vmem [shape: f32[256,8], index: 1, kind: input, shape index: {}]
  %s2 = inlined_call_operand.vmem [shape: f32[256,1], index: 2, kind: input, shape index: {}]
  %s3 = inlined_call_operand.vmem [shape: bf16[256,256], index: 3, kind: input, shape index: {}]
  %s4 = inlined_call_operand.vmem [shape: f32[256,1], index: 4, kind: input, shape index: {}]
  %s5 = inlined_call_operand.vmem [shape: f32[1,256], index: 5, kind: input, shape index: {}]
  %s6 = inlined_call_operand.<no memory space> [shape: f32[1,1], index: 6, kind: input, shape index: {}]
  %s7 = inlined_call_operand.hbm [shape: f32[1,128], index: 7, kind: output, shape index: {}]
  %s8 = sld [smem:[#allocation0]]
  $region38: #{tpu_custom_call.1} parent=0
    _
  %s10 = ssub.s32 1, %s8
  %s11 = scalar_select 0, %s10, %s8
  %12 = sst [smem:[#allocation2]] %s6
  $region1: #{tpu_custom_call.1} parent=0
    #allocation3 [shape = 'u8[512]{0}', space=vmem, size = 0x400, scoped, tag = 'output window, operand 0, single buffered']
    #allocation4 [shape = 's32[1]{0}', space=sflag, size = 0x4, scoped, tag = 'scoped memory for tpu_custom_call.1']
    %13 = vsyncpa [#allocation4], 0
    // Predicated region
    $region2: #{tpu_custom_call.1} parent=1 // pred_check
      _
    $region3: #{tpu_custom_call.1} parent=1 // pred_check_branch
      %15 = sbr.rel (0) target = $region5
    $region4: #{tpu_custom_call.1} parent=1 // pred_region
      _
    $region5: #{tpu_custom_call.1} parent=1 // pred_fallthru
      _
    // Predicated region
    $region6: #{tpu_custom_call.1} parent=1 // pred_check
      _
    $region7: #{tpu_custom_call.1} parent=1 // pred_check_branch
      %17 = sbr.rel (0) target = $region9
    $region8: #{tpu_custom_call.1} parent=1 // pred_region
      _
    $region9: #{tpu_custom_call.1} parent=1 // pred_fallthru
      _
    // Predicated region
    $region10: #{tpu_custom_call.1} parent=1 // pred_check
      _
    $region11: #{tpu_custom_call.1} parent=1 // pred_check_branch
      %19 = sbr.rel (0) target = $region13
    $region12: #{tpu_custom_call.1} parent=1 // pred_region
      _
    $region13: #{tpu_custom_call.1} parent=1 // pred_fallthru
      _
    // Predicated region
    $region14: #{tpu_custom_call.1} parent=1 // pred_check
      _
    $region15: #{tpu_custom_call.1} parent=1 // pred_check_branch
      %21 = sbr.rel (0) target = $region17
    $region16: #{tpu_custom_call.1} parent=1 // pred_region
      _
    $region17: #{tpu_custom_call.1} parent=1 // pred_fallthru
      _
    // Predicated region
    $region18: #{tpu_custom_call.1} parent=1 // pred_check
      _
    $region19: #{tpu_custom_call.1} parent=1 // pred_check_branch
      %23 = sbr.rel (0) target = $region21
    $region20: #{tpu_custom_call.1} parent=1 // pred_region
      _
    $region21: #{tpu_custom_call.1} parent=1 // pred_fallthru
      _
    // Predicated region
    $region22: #{tpu_custom_call.1} parent=1 // pred_check
      _
    $region23: #{tpu_custom_call.1} parent=1 // pred_check_branch
      %25 = sbr.rel (0) target = $region25
    $region24: #{tpu_custom_call.1} parent=1 // pred_region
      _
    $region25: #{tpu_custom_call.1} parent=1 // pred_fallthru
      _
    // Predicated region
    $region26: #{tpu_custom_call.1} parent=1 // pred_check
      _
    $region27: #{tpu_custom_call.1} parent=1 // pred_check_branch
      %27 = sbr.rel (0) target = $region29
    $region28: #{tpu_custom_call.1} parent=1 // pred_region
      _
    $region29: #{tpu_custom_call.1} parent=1 // pred_fallthru
      _
    %v29 = vld [vmem:[%s0] sm:$0xff]
    %v30 = vld [vmem:[%s1] sm:$0xff]
    %v31 = vld [vmem:[%s1 + $0x8] sm:$0xff]
    %v32 = vld [vmem:[%s1 + $0x10] sm:$0xff]
    %v33 = vld [vmem:[%s1 + $0x18] sm:$0xff]
    %v34 = vld [vmem:[%s1 + $0x20] sm:$0xff]
    %v35 = vld [vmem:[%s1 + $0x28] sm:$0xff]
    %v36 = vld [vmem:[%s1 + $0x30] sm:$0xff]
    %v37 = vld [vmem:[%s1 + $0x38] sm:$0xff]
    %v38 = vld [vmem:[%s1 + $0x40] sm:$0xff]
    %v39 = vld [vmem:[%s1 + $0x48] sm:$0xff]
    %v40 = vld [vmem:[%s1 + $0x50] sm:$0xff]
    %v41 = vld [vmem:[%s1 + $0x58] sm:$0xff]
    %v42 = vld [vmem:[%s1 + $0x60] sm:$0xff]
    %v43 = vld [vmem:[%s1 + $0x68] sm:$0xff]
    %v44 = vld [vmem:[%s1 + $0x70] sm:$0xff]
    %v45 = vld [vmem:[%s1 + $0x78] sm:$0xff]
    %v46 = vld [vmem:[%s1 + $0x80] sm:$0xff]
    %v47 = vld [vmem:[%s1 + $0x88] sm:$0xff]
    %v48 = vld [vmem:[%s1 + $0x90] sm:$0xff]
    %v49 = vld [vmem:[%s1 + $0x98] sm:$0xff]
    %v50 = vld [vmem:[%s1 + $0xa0] sm:$0xff]
    %v51 = vld [vmem:[%s1 + $0xa8] sm:$0xff]
    %v52 = vld [vmem:[%s1 + $0xb0] sm:$0xff]
    %v53 = vld [vmem:[%s1 + $0xb8] sm:$0xff]
    %v54 = vld [vmem:[%s1 + $0xc0] sm:$0xff]
    %v55 = vld [vmem:[%s1 + $0xc8] sm:$0xff]
    %v56 = vld [vmem:[%s1 + $0xd0] sm:$0xff]
    %v57 = vld [vmem:[%s1 + $0xd8] sm:$0xff]
    %v58 = vld [vmem:[%s1 + $0xe0] sm:$0xff]
    %v59 = vld [vmem:[%s1 + $0xe8] sm:$0xff]
    %v60 = vld [vmem:[%s1 + $0xf0] sm:$0xff]
    %v61 = vld [vmem:[%s1 + $0xf8] sm:$0xff]
    %vm62 = vcmask 64512
    %v64 = vsel %vm62, %v30, 0
    %v67 = vsel %vm62, %v31, 0
    %v70 = vsel %vm62, %v32, 0
    %v73 = vsel %vm62, %v33, 0
    %v76 = vsel %vm62, %v34, 0
    %v79 = vsel %vm62, %v35, 0
    %v82 = vsel %vm62, %v36, 0
    %v85 = vsel %vm62, %v37, 0
    %v88 = vsel %vm62, %v38, 0
    %v91 = vsel %vm62, %v39, 0
    %v94 = vsel %vm62, %v40, 0
    %v97 = vsel %vm62, %v41, 0
    %v100 = vsel %vm62, %v42, 0
    %v103 = vsel %vm62, %v43, 0
    %v106 = vsel %vm62, %v44, 0
    %v109 = vsel %vm62, %v45, 0
    %v112 = vsel %vm62, %v46, 0
    %v115 = vsel %vm62, %v47, 0
    %v118 = vsel %vm62, %v48, 0
    %v121 = vsel %vm62, %v49, 0
    %v124 = vsel %vm62, %v50, 0
    %v127 = vsel %vm62, %v51, 0
    %v130 = vsel %vm62, %v52, 0
    %v133 = vsel %vm62, %v53, 0
    %v136 = vsel %vm62, %v54, 0
    %v139 = vsel %vm62, %v55, 0
    %v142 = vsel %vm62, %v56, 0
    %v145 = vsel %vm62, %v57, 0
    %v148 = vsel %vm62, %v58, 0
    %v151 = vsel %vm62, %v59, 0
    %v154 = vsel %vm62, %v60, 0
    %v157 = vsel %vm62, %v61, 0
    %159 = vmatprep.subr.mxu0 0.0
    %160 = vmatpush1.msra.mxu0 0.0
    %161 = vmatprep.subr.mxu0 0.0
    %162 = vmatpush1.msra.mxu0 0.0
    %163 = vmatprep.subr.mxu0 0.0
    %164 = vmatpush1.msra.mxu0 0.0
    %165 = vmatprep.subr.mxu0 0.0
    %166 = vmatpush1.msra.mxu0 0.0
    %167 = vmatprep.subr.mxu0 0.0
    %168 = vmatpush1.msra.mxu0 0.0
    %169 = vmatprep.subr.mxu0 0.0
    %170 = vmatpush1.msra.mxu0 0.0
    %171 = vmatprep.subr.mxu0 0.0
    %172 = vmatpush1.msra.mxu0 0.0
    %173 = vmatprep.subr.mxu0 0.0
    %174 = vmatpush1.msra.mxu0 0.0
    %175 = vmatprep.subr.mxu0 0.0
    %176 = vmatpush1.msra.mxu0 0.0
    %177 = vmatprep.subr.mxu0 0.0
    %178 = vmatpush1.msra.mxu0 0.0
    %179 = vmatprep.subr.mxu0 0.0
    %180 = vmatpush1.msra.mxu0 0.0
    %181 = vmatprep.subr.mxu0 0.0
    %182 = vmatpush1.msra.mxu0 0.0
    %183 = vmatprep.subr.mxu0 0.0
    %184 = vmatpush1.msra.mxu0 0.0
    %185 = vmatprep.subr.mxu0 0.0
    %186 = vmatpush1.msra.mxu0 0.0
    %187 = vmatprep.subr.mxu0 0.0
    %188 = vmatpush1.msra.mxu0 0.0
    %189 = vmatprep.subr.mxu0 0.0
    %190 = vmatpush1.msra.mxu0 %v29
    %191 = vmatprep.subr.mxu0 0.0
    %192 = vmatpush2.msra.mxu0 0.0
    %193 = vmatprep.subr.mxu0 0.0
    %194 = vmatpush2.msra.mxu0 0.0
    %195 = vmatprep.subr.mxu0 0.0
    %196 = vmatpush2.msra.mxu0 0.0
    %197 = vmatprep.subr.mxu0 0.0
    %198 = vmatpush2.msra.mxu0 0.0
    %199 = vmatprep.subr.mxu0 0.0
    %200 = vmatpush2.msra.mxu0 0.0
    %201 = vmatprep.subr.mxu0 0.0
    %202 = vmatpush2.msra.mxu0 0.0
    %203 = vmatprep.subr.mxu0 0.0
    %204 = vmatpush2.msra.mxu0 0.0
    %205 = vmatprep.subr.mxu0 0.0
    %206 = vmatpush2.msra.mxu0 0.0
    %207 = vmatprep.subr.mxu0 0.0
    %208 = vmatpush2.msra.mxu0 0.0
    %209 = vmatprep.subr.mxu0 0.0
    %210 = vmatpush2.msra.mxu0 0.0
    %211 = vmatprep.subr.mxu0 0.0
    %212 = vmatpush2.msra.mxu0 0.0
    %213 = vmatprep.subr.mxu0 0.0
    %214 = vmatpush2.msra.mxu0 0.0
    %215 = vmatprep.subr.mxu0 0.0
    %216 = vmatpush2.msra.mxu0 0.0
    %217 = vmatprep.subr.mxu0 0.0
    %218 = vmatpush2.msra.mxu0 0.0
    %219 = vmatprep.subr.mxu0 0.0
    %220 = vmatpush2.msra.mxu0 0.0
    %221 = vmatprep.subr.mxu0 0.0
    %222 = vmatpush2.msra.mxu0 0.0
    %223 = vmatprep.mubr.f32.mxu0 0.0
    %224 = vmatmul.mubr.f32.gmra.mxu0 %v64
    %v225 = vpop.f32.mrf.mxu0
    %v226 = vadd.f32 0.0, %v225
    %v227 = vpop.f32.mrf.mxu0
    %228 = vmatprep.mubr.f32.mxu0 0.0
    %229 = vmatmul.mubr.f32.gmra.mxu0 %v67
    %v230 = vpop.f32.mrf.mxu0
    %v231 = vadd.f32 0.0, %v230
    %v232 = vpop.f32.mrf.mxu0
    %233 = vmatprep.mubr.f32.mxu0 0.0
    %234 = vmatmul.mubr.f32.gmra.mxu0 %v70
    %v235 = vpop.f32.mrf.mxu0
    %v236 = vadd.f32 0.0, %v235
    %v237 = vpop.f32.mrf.mxu0
    %238 = vmatprep.mubr.f32.mxu0 0.0
    %239 = vmatmul.mubr.f32.gmra.mxu0 %v73
    %v240 = vpop.f32.mrf.mxu0
    %v241 = vadd.f32 0.0, %v240
    %v242 = vpop.f32.mrf.mxu0
    %243 = vmatprep.mubr.f32.mxu0 0.0
    %244 = vmatmul.mubr.f32.gmra.mxu0 %v76
    %v245 = vpop.f32.mrf.mxu0
    %v246 = vadd.f32 0.0, %v245
    %v247 = vpop.f32.mrf.mxu0
    %248 = vmatprep.mubr.f32.mxu0 0.0
    %249 = vmatmul.mubr.f32.gmra.mxu0 %v79
    %v250 = vpop.f32.mrf.mxu0
    %v251 = vadd.f32 0.0, %v250
    %v252 = vpop.f32.mrf.mxu0
    %253 = vmatprep.mubr.f32.mxu0 0.0
    %254 = vmatmul.mubr.f32.gmra.mxu0 %v82
    %v255 = vpop.f32.mrf.mxu0
    %v256 = vadd.f32 0.0, %v255
    %v257 = vpop.f32.mrf.mxu0
    %258 = vmatprep.mubr.f32.mxu0 0.0
    %259 = vmatmul.mubr.f32.gmra.mxu0 %v85
    %v260 = vpop.f32.mrf.mxu0
    %v261 = vadd.f32 0.0, %v260
    %v262 = vpop.f32.mrf.mxu0
    %263 = vmatprep.mubr.f32.mxu0 0.0
    %264 = vmatmul.mubr.f32.gmra.mxu0 %v88
    %v265 = vpop.f32.mrf.mxu0
    %v266 = vadd.f32 0.0, %v265
    %v267 = vpop.f32.mrf.mxu0
    %268 = vmatprep.mubr.f32.mxu0 0.0
    %269 = vmatmul.mubr.f32.gmra.mxu0 %v91
    %v270 = vpop.f32.mrf.mxu0
    %v271 = vadd.f32 0.0, %v270
    %v272 = vpop.f32.mrf.mxu0
    %273 = vmatprep.mubr.f32.mxu0 0.0
    %274 = vmatmul.mubr.f32.gmra.mxu0 %v94
    %v275 = vpop.f32.mrf.mxu0
    %v276 = vadd.f32 0.0, %v275
    %v277 = vpop.f32.mrf.mxu0
    %278 = vmatprep.mubr.f32.mxu0 0.0
    %279 = vmatmul.mubr.f32.gmra.mxu0 %v97
    %v280 = vpop.f32.mrf.mxu0
    %v281 = vadd.f32 0.0, %v280
    %v282 = vpop.f32.mrf.mxu0
    %283 = vmatprep.mubr.f32.mxu0 0.0
    %284 = vmatmul.mubr.f32.gmra.mxu0 %v100
    %v285 = vpop.f32.mrf.mxu0
    %v286 = vadd.f32 0.0, %v285
    %v287 = vpop.f32.mrf.mxu0
    %288 = vmatprep.mubr.f32.mxu0 0.0
    %289 = vmatmul.mubr.f32.gmra.mxu0 %v103
    %v290 = vpop.f32.mrf.mxu0
    %v291 = vadd.f32 0.0, %v290
    %v292 = vpop.f32.mrf.mxu0
    %293 = vmatprep.mubr.f32.mxu0 0.0
    %294 = vmatmul.mubr.f32.gmra.mxu0 %v106
    %v295 = vpop.f32.mrf.mxu0
    %v296 = vadd.f32 0.0, %v295
    %v297 = vpop.f32.mrf.mxu0
    %298 = vmatprep.mubr.f32.mxu0 0.0
    %299 = vmatmul.mubr.f32.gmra.mxu0 %v109
    %v300 = vpop.f32.mrf.mxu0
    %v301 = vadd.f32 0.0, %v300
    %v302 = vpop.f32.mrf.mxu0
    %303 = vmatprep.mubr.f32.mxu0 0.0
    %304 = vmatmul.mubr.f32.gmra.mxu0 %v112
    %v305 = vpop.f32.mrf.mxu0
    %v306 = vadd.f32 0.0, %v305
    %v307 = vpop.f32.mrf.mxu0
    %308 = vmatprep.mubr.f32.mxu0 0.0
    %309 = vmatmul.mubr.f32.gmra.mxu0 %v115
    %v310 = vpop.f32.mrf.mxu0
    %v311 = vadd.f32 0.0, %v310
    %v312 = vpop.f32.mrf.mxu0
    %313 = vmatprep.mubr.f32.mxu0 0.0
    %314 = vmatmul.mubr.f32.gmra.mxu0 %v118
    %v315 = vpop.f32.mrf.mxu0
    %v316 = vadd.f32 0.0, %v315
    %v317 = vpop.f32.mrf.mxu0
    %318 = vmatprep.mubr.f32.mxu0 0.0
    %319 = vmatmul.mubr.f32.gmra.mxu0 %v121
    %v320 = vpop.f32.mrf.mxu0
    %v321 = vadd.f32 0.0, %v320
    %v322 = vpop.f32.mrf.mxu0
    %323 = vmatprep.mubr.f32.mxu0 0.0
    %324 = vmatmul.mubr.f32.gmra.mxu0 %v124
    %v325 = vpop.f32.mrf.mxu0
    %v326 = vadd.f32 0.0, %v325
    %v327 = vpop.f32.mrf.mxu0
    %328 = vmatprep.mubr.f32.mxu0 0.0
    %329 = vmatmul.mubr.f32.gmra.mxu0 %v127
    %v330 = vpop.f32.mrf.mxu0
    %v331 = vadd.f32 0.0, %v330
    %v332 = vpop.f32.mrf.mxu0
    %333 = vmatprep.mubr.f32.mxu0 0.0
    %334 = vmatmul.mubr.f32.gmra.mxu0 %v130
    %v335 = vpop.f32.mrf.mxu0
    %v336 = vadd.f32 0.0, %v335
    %v337 = vpop.f32.mrf.mxu0
    %338 = vmatprep.mubr.f32.mxu0 0.0
    %339 = vmatmul.mubr.f32.gmra.mxu0 %v133
    %v340 = vpop.f32.mrf.mxu0
    %v341 = vadd.f32 0.0, %v340
    %v342 = vpop.f32.mrf.mxu0
    %343 = vmatprep.mubr.f32.mxu0 0.0
    %344 = vmatmul.mubr.f32.gmra.mxu0 %v136
    %v345 = vpop.f32.mrf.mxu0
    %v346 = vadd.f32 0.0, %v345
    %v347 = vpop.f32.mrf.mxu0
    %348 = vmatprep.mubr.f32.mxu0 0.0
    %349 = vmatmul.mubr.f32.gmra.mxu0 %v139
    %v350 = vpop.f32.mrf.mxu0
    %v351 = vadd.f32 0.0, %v350
    %v352 = vpop.f32.mrf.mxu0
    %353 = vmatprep.mubr.f32.mxu0 0.0
    %354 = vmatmul.mubr.f32.gmra.mxu0 %v142
    %v355 = vpop.f32.mrf.mxu0
    %v356 = vadd.f32 0.0, %v355
    %v357 = vpop.f32.mrf.mxu0
    %358 = vmatprep.mubr.f32.mxu0 0.0
    %359 = vmatmul.mubr.f32.gmra.mxu0 %v145
    %v360 = vpop.f32.mrf.mxu0
    %v361 = vadd.f32 0.0, %v360
    %v362 = vpop.f32.mrf.mxu0
    %363 = vmatprep.mubr.f32.mxu0 0.0
    %364 = vmatmul.mubr.f32.gmra.mxu0 %v148
    %v365 = vpop.f32.mrf.mxu0
    %v366 = vadd.f32 0.0, %v365
    %v367 = vpop.f32.mrf.mxu0
    %368 = vmatprep.mubr.f32.mxu0 0.0
    %369 = vmatmul.mubr.f32.gmra.mxu0 %v151
    %v370 = vpop.f32.mrf.mxu0
    %v371 = vadd.f32 0.0, %v370
    %v372 = vpop.f32.mrf.mxu0
    %373 = vmatprep.mubr.f32.mxu0 0.0
    %374 = vmatmul.mubr.f32.gmra.mxu0 %v154
    %v375 = vpop.f32.mrf.mxu0
    %v376 = vadd.f32 0.0, %v375
    %v377 = vpop.f32.mrf.mxu0
    %378 = vmatprep.mubr.f32.mxu0 0.0
    %379 = vmatmul.mubr.f32.gmra.mxu0 %v157
    %v380 = vpop.f32.mrf.mxu0
    %v381 = vadd.f32 0.0, %v380
    %v382 = vpop.f32.mrf.mxu0
    %383 = vdwg.mxu0
    %v384 = vpack.c.bf16 %v231, %v226
    %v385 = vpack.c.bf16 %v241, %v236
    %v386 = vpack.c.bf16 %v251, %v246
    %v387 = vpack.c.bf16 %v261, %v256
    %v388 = vpack.c.bf16 %v271, %v266
    %v389 = vpack.c.bf16 %v281, %v276
    %v390 = vpack.c.bf16 %v291, %v286
    %v391 = vpack.c.bf16 %v301, %v296
    %v392 = vpack.c.bf16 %v311, %v306
    %v393 = vpack.c.bf16 %v321, %v316
    %v394 = vpack.c.bf16 %v331, %v326
    %v395 = vpack.c.bf16 %v341, %v336
    %v396 = vpack.c.bf16 %v351, %v346
    %v397 = vpack.c.bf16 %v361, %v356
    %v398 = vpack.c.bf16 %v371, %v366
    %v399 = vpack.c.bf16 %v381, %v376
    %v400 = vld [vmem:[%s2] sm:$0xff]
    %v401 = vld [vmem:[%s2 + $0x8] sm:$0xff]
    %v402 = vld [vmem:[%s2 + $0x10] sm:$0xff]
    %v403 = vld [vmem:[%s2 + $0x18] sm:$0xff]
    %v404 = vld [vmem:[%s2 + $0x20] sm:$0xff]
    %v405 = vld [vmem:[%s2 + $0x28] sm:$0xff]
    %v406 = vld [vmem:[%s2 + $0x30] sm:$0xff]
    %v407 = vld [vmem:[%s2 + $0x38] sm:$0xff]
    %v408 = vld [vmem:[%s2 + $0x40] sm:$0xff]
    %v409 = vld [vmem:[%s2 + $0x48] sm:$0xff]
    %v410 = vld [vmem:[%s2 + $0x50] sm:$0xff]
    %v411 = vld [vmem:[%s2 + $0x58] sm:$0xff]
    %v412 = vld [vmem:[%s2 + $0x60] sm:$0xff]
    %v413 = vld [vmem:[%s2 + $0x68] sm:$0xff]
    %v414 = vld [vmem:[%s2 + $0x70] sm:$0xff]
    %v415 = vld [vmem:[%s2 + $0x78] sm:$0xff]
    %v416 = vld [vmem:[%s2 + $0x80] sm:$0xff]
    %v417 = vld [vmem:[%s2 + $0x88] sm:$0xff]
    %v418 = vld [vmem:[%s2 + $0x90] sm:$0xff]
    %v419 = vld [vmem:[%s2 + $0x98] sm:$0xff]
    %v420 = vld [vmem:[%s2 + $0xa0] sm:$0xff]
    %v421 = vld [vmem:[%s2 + $0xa8] sm:$0xff]
    %v422 = vld [vmem:[%s2 + $0xb0] sm:$0xff]
    %v423 = vld [vmem:[%s2 + $0xb8] sm:$0xff]
    %v424 = vld [vmem:[%s2 + $0xc0] sm:$0xff]
    %v425 = vld [vmem:[%s2 + $0xc8] sm:$0xff]
    %v426 = vld [vmem:[%s2 + $0xd0] sm:$0xff]
    %v427 = vld [vmem:[%s2 + $0xd8] sm:$0xff]
    %v428 = vld [vmem:[%s2 + $0xe0] sm:$0xff]
    %v429 = vld [vmem:[%s2 + $0xe8] sm:$0xff]
    %v430 = vld [vmem:[%s2 + $0xf0] sm:$0xff]
    %v431 = vld [vmem:[%s2 + $0xf8] sm:$0xff]
    %v432 = vpack.c.bf16 %v401, %v400
    %v433 = vpack.c.bf16 %v403, %v402
    %v434 = vpack.c.bf16 %v405, %v404
    %v435 = vpack.c.bf16 %v407, %v406
    %v436 = vpack.c.bf16 %v409, %v408
    %v437 = vpack.c.bf16 %v411, %v410
    %v438 = vpack.c.bf16 %v413, %v412
    %v439 = vpack.c.bf16 %v415, %v414
    %v440 = vpack.c.bf16 %v417, %v416
    %v441 = vpack.c.bf16 %v419, %v418
    %v442 = vpack.c.bf16 %v421, %v420
    %v443 = vpack.c.bf16 %v423, %v422
    %v444 = vpack.c.bf16 %v425, %v424
    %v445 = vpack.c.bf16 %v427, %v426
    %v446 = vpack.c.bf16 %v429, %v428
    %v447 = vpack.c.bf16 %v431, %v430
    %449 = vset.pattern.permute.xlu0 0
    %450 = vperm.xlu0 %449, %v432
    %v451 = vpop.permute.xlu0 %450
    %454 = vset.pattern.permute.xlu0 0
    %455 = vperm.xlu0 %454, %v433
    %v456 = vpop.permute.xlu0 %455
    %459 = vset.pattern.permute.xlu0 0
    %460 = vperm.xlu0 %459, %v434
    %v461 = vpop.permute.xlu0 %460
    %464 = vset.pattern.permute.xlu0 0
    %465 = vperm.xlu0 %464, %v435
    %v466 = vpop.permute.xlu0 %465
    %469 = vset.pattern.permute.xlu0 0
    %470 = vperm.xlu0 %469, %v436
    %v471 = vpop.permute.xlu0 %470
    %474 = vset.pattern.permute.xlu0 0
    %475 = vperm.xlu0 %474, %v437
    %v476 = vpop.permute.xlu0 %475
    %479 = vset.pattern.permute.xlu0 0
    %480 = vperm.xlu0 %479, %v438
    %v481 = vpop.permute.xlu0 %480
    %484 = vset.pattern.permute.xlu0 0
    %485 = vperm.xlu0 %484, %v439
    %v486 = vpop.permute.xlu0 %485
    %489 = vset.pattern.permute.xlu0 0
    %490 = vperm.xlu0 %489, %v440
    %v491 = vpop.permute.xlu0 %490
    %494 = vset.pattern.permute.xlu0 0
    %495 = vperm.xlu0 %494, %v441
    %v496 = vpop.permute.xlu0 %495
    %499 = vset.pattern.permute.xlu0 0
    %500 = vperm.xlu0 %499, %v442
    %v501 = vpop.permute.xlu0 %500
    %504 = vset.pattern.permute.xlu0 0
    %505 = vperm.xlu0 %504, %v443
    %v506 = vpop.permute.xlu0 %505
    %509 = vset.pattern.permute.xlu0 0
    %510 = vperm.xlu0 %509, %v444
    %v511 = vpop.permute.xlu0 %510
    %514 = vset.pattern.permute.xlu0 0
    %515 = vperm.xlu0 %514, %v445
    %v516 = vpop.permute.xlu0 %515
    %519 = vset.pattern.permute.xlu0 0
    %520 = vperm.xlu0 %519, %v446
    %v521 = vpop.permute.xlu0 %520
    %524 = vset.pattern.permute.xlu0 0
    %525 = vperm.xlu0 %524, %v447
    %v526 = vpop.permute.xlu0 %525
    %v528 = vadd.bf16 %v384, %v451
    %v529 = vadd.bf16 %v385, %v456
    %v530 = vadd.bf16 %v386, %v461
    %v531 = vadd.bf16 %v387, %v466
    %v532 = vadd.bf16 %v388, %v471
    %v533 = vadd.bf16 %v389, %v476
    %v534 = vadd.bf16 %v390, %v481
    %v535 = vadd.bf16 %v391, %v486
    %v536 = vadd.bf16 %v392, %v491
    %v537 = vadd.bf16 %v393, %v496
    %v538 = vadd.bf16 %v394, %v501
    %v539 = vadd.bf16 %v395, %v506
    %v540 = vadd.bf16 %v396, %v511
    %v541 = vadd.bf16 %v397, %v516
    %v542 = vadd.bf16 %v398, %v521
    %v543 = vadd.bf16 %v399, %v526
    %v544 = vmax.bf16 %v528, 0
    %v545 = vmax.bf16 %v529, 0
    %v546 = vmax.bf16 %v530, 0
    %v547 = vmax.bf16 %v531, 0
    %v548 = vmax.bf16 %v532, 0
    %v549 = vmax.bf16 %v533, 0
    %v550 = vmax.bf16 %v534, 0
    %v551 = vmax.bf16 %v535, 0
    %v552 = vmax.bf16 %v536, 0
    %v553 = vmax.bf16 %v537, 0
    %v554 = vmax.bf16 %v538, 0
    %v555 = vmax.bf16 %v539, 0
    %v556 = vmax.bf16 %v540, 0
    %v557 = vmax.bf16 %v541, 0
    %v558 = vmax.bf16 %v542, 0
    %v559 = vmax.bf16 %v543, 0
    %v560 = vld [vmem:[%s3] sm:$0xff]
    %v561 = vld [vmem:[%s3 + $0x8] sm:$0xff]
    %v562 = vld [vmem:[%s3 + $0x10] sm:$0xff]
    %v563 = vld [vmem:[%s3 + $0x18] sm:$0xff]
    %v564 = vld [vmem:[%s3 + $0x20] sm:$0xff]
    %v565 = vld [vmem:[%s3 + $0x28] sm:$0xff]
    %v566 = vld [vmem:[%s3 + $0x30] sm:$0xff]
    %v567 = vld [vmem:[%s3 + $0x38] sm:$0xff]
    %v568 = vld [vmem:[%s3 + $0x40] sm:$0xff]
    %v569 = vld [vmem:[%s3 + $0x48] sm:$0xff]
    %v570 = vld [vmem:[%s3 + $0x50] sm:$0xff]
    %v571 = vld [vmem:[%s3 + $0x58] sm:$0xff]
    %v572 = vld [vmem:[%s3 + $0x60] sm:$0xff]
    %v573 = vld [vmem:[%s3 + $0x68] sm:$0xff]
    %v574 = vld [vmem:[%s3 + $0x70] sm:$0xff]
    %v575 = vld [vmem:[%s3 + $0x78] sm:$0xff]
    %v576 = vld [vmem:[%s3 + $0x80] sm:$0xff]
    %v577 = vld [vmem:[%s3 + $0x88] sm:$0xff]
    %v578 = vld [vmem:[%s3 + $0x90] sm:$0xff]
    %v579 = vld [vmem:[%s3 + $0x98] sm:$0xff]
    %v580 = vld [vmem:[%s3 + $0xa0] sm:$0xff]
    %v581 = vld [vmem:[%s3 + $0xa8] sm:$0xff]
    %v582 = vld [vmem:[%s3 + $0xb0] sm:$0xff]
    %v583 = vld [vmem:[%s3 + $0xb8] sm:$0xff]
    %v584 = vld [vmem:[%s3 + $0xc0] sm:$0xff]
    %v585 = vld [vmem:[%s3 + $0xc8] sm:$0xff]
    %v586 = vld [vmem:[%s3 + $0xd0] sm:$0xff]
    %v587 = vld [vmem:[%s3 + $0xd8] sm:$0xff]
    %v588 = vld [vmem:[%s3 + $0xe0] sm:$0xff]
    %v589 = vld [vmem:[%s3 + $0xe8] sm:$0xff]
    %v590 = vld [vmem:[%s3 + $0xf0] sm:$0xff]
    %v591 = vld [vmem:[%s3 + $0xf8] sm:$0xff]
    %v624 = vunpack.c.l.b16 %v560
    %v625 = vunpack.c.h.b16 %v560
    %v626 = vunpack.c.l.b16 %v561
    %v627 = vunpack.c.h.b16 %v561
    %v628 = vunpack.c.l.b16 %v562
    %v629 = vunpack.c.h.b16 %v562
    %v630 = vunpack.c.l.b16 %v563
    %v631 = vunpack.c.h.b16 %v563
    %v632 = vunpack.c.l.b16 %v564
    %v633 = vunpack.c.h.b16 %v564
    %v634 = vunpack.c.l.b16 %v565
    %v635 = vunpack.c.h.b16 %v565
    %v636 = vunpack.c.l.b16 %v566
    %v637 = vunpack.c.h.b16 %v566
    %v638 = vunpack.c.l.b16 %v567
    %v639 = vunpack.c.h.b16 %v567
    %v640 = vunpack.c.l.b16 %v568
    %v641 = vunpack.c.h.b16 %v568
    %v642 = vunpack.c.l.b16 %v569
    %v643 = vunpack.c.h.b16 %v569
    %v644 = vunpack.c.l.b16 %v570
    %v645 = vunpack.c.h.b16 %v570
    %v646 = vunpack.c.l.b16 %v571
    %v647 = vunpack.c.h.b16 %v571
    %v648 = vunpack.c.l.b16 %v572
    %v649 = vunpack.c.h.b16 %v572
    %v650 = vunpack.c.l.b16 %v573
    %v651 = vunpack.c.h.b16 %v573
    %v652 = vunpack.c.l.b16 %v574
    %v653 = vunpack.c.h.b16 %v574
    %v654 = vunpack.c.l.b16 %v575
    %v655 = vunpack.c.h.b16 %v575
    %v656 = vunpack.c.l.b16 %v576
    %v657 = vunpack.c.h.b16 %v576
    %v658 = vunpack.c.l.b16 %v577
    %v659 = vunpack.c.h.b16 %v577
    %v660 = vunpack.c.l.b16 %v578
    %v661 = vunpack.c.h.b16 %v578
    %v662 = vunpack.c.l.b16 %v579
    %v663 = vunpack.c.h.b16 %v579
    %v664 = vunpack.c.l.b16 %v580
    %v665 = vunpack.c.h.b16 %v580
    %v666 = vunpack.c.l.b16 %v581
    %v667 = vunpack.c.h.b16 %v581
    %v668 = vunpack.c.l.b16 %v582
    %v669 = vunpack.c.h.b16 %v582
    %v670 = vunpack.c.l.b16 %v583
    %v671 = vunpack.c.h.b16 %v583
    %v672 = vunpack.c.l.b16 %v584
    %v673 = vunpack.c.h.b16 %v584
    %v674 = vunpack.c.l.b16 %v585
    %v675 = vunpack.c.h.b16 %v585
    %v676 = vunpack.c.l.b16 %v586
    %v677 = vunpack.c.h.b16 %v586
    %v678 = vunpack.c.l.b16 %v587
    %v679 = vunpack.c.h.b16 %v587
    %v680 = vunpack.c.l.b16 %v588
    %v681 = vunpack.c.h.b16 %v588
    %v682 = vunpack.c.l.b16 %v589
    %v683 = vunpack.c.h.b16 %v589
    %v684 = vunpack.c.l.b16 %v590
    %v685 = vunpack.c.h.b16 %v590
    %v686 = vunpack.c.l.b16 %v591
    %v687 = vunpack.c.h.b16 %v591
    %v688 = vpack.c.b16 %v626, %v624
    %v689 = vpack.c.b16 %v627, %v625
    %v690 = vpack.c.b16 %v630, %v628
    %v691 = vpack.c.b16 %v631, %v629
    %v692 = vpack.c.b16 %v634, %v632
    %v693 = vpack.c.b16 %v635, %v633
    %v694 = vpack.c.b16 %v638, %v636
    %v695 = vpack.c.b16 %v639, %v637
    %v696 = vpack.c.b16 %v642, %v640
    %v697 = vpack.c.b16 %v643, %v641
    %v698 = vpack.c.b16 %v646, %v644
    %v699 = vpack.c.b16 %v647, %v645
    %v700 = vpack.c.b16 %v650, %v648
    %v701 = vpack.c.b16 %v651, %v649
    %v702 = vpack.c.b16 %v654, %v652
    %v703 = vpack.c.b16 %v655, %v653
    %v704 = vpack.c.b16 %v658, %v656
    %v705 = vpack.c.b16 %v659, %v657
    %v706 = vpack.c.b16 %v662, %v660
    %v707 = vpack.c.b16 %v663, %v661
    %v708 = vpack.c.b16 %v666, %v664
    %v709 = vpack.c.b16 %v667, %v665
    %v710 = vpack.c.b16 %v670, %v668
    %v711 = vpack.c.b16 %v671, %v669
    %v712 = vpack.c.b16 %v674, %v672
    %v713 = vpack.c.b16 %v675, %v673
    %v714 = vpack.c.b16 %v678, %v676
    %v715 = vpack.c.b16 %v679, %v677
    %v716 = vpack.c.b16 %v682, %v680
    %v717 = vpack.c.b16 %v683, %v681
    %v718 = vpack.c.b16 %v686, %v684
    %v719 = vpack.c.b16 %v687, %v685
    %752 = vmatprep.subr.bf16.mxu0 0
    %753 = vmatpush1.bf16.msra.mxu0 %v551
    %754 = vmatprep.subr.bf16.mxu0 0
    %755 = vmatpush1.bf16.msra.mxu0 %v550
    %756 = vmatprep.subr.bf16.mxu0 0
    %757 = vmatpush1.bf16.msra.mxu0 %v549
    %758 = vmatprep.subr.bf16.mxu0 0
    %759 = vmatpush1.bf16.msra.mxu0 %v548
    %760 = vmatprep.subr.bf16.mxu0 0
    %761 = vmatpush1.bf16.msra.mxu0 %v547
    %762 = vmatprep.subr.bf16.mxu0 0
    %763 = vmatpush1.bf16.msra.mxu0 %v546
    %764 = vmatprep.subr.bf16.mxu0 0
    %765 = vmatpush1.bf16.msra.mxu0 %v545
    %766 = vmatprep.subr.bf16.mxu0 0
    %767 = vmatpush1.bf16.msra.mxu0 %v544
    %768 = vmatprep.subr.bf16.mxu0 0
    %769 = vmatpush2.bf16.msra.mxu0 %v559
    %770 = vmatprep.subr.bf16.mxu0 0
    %771 = vmatpush2.bf16.msra.mxu0 %v558
    %772 = vmatprep.subr.bf16.mxu0 0
    %773 = vmatpush2.bf16.msra.mxu0 %v557
    %774 = vmatprep.subr.bf16.mxu0 0
    %775 = vmatpush2.bf16.msra.mxu0 %v556
    %776 = vmatprep.subr.bf16.mxu0 0
    %777 = vmatpush2.bf16.msra.mxu0 %v555
    %778 = vmatprep.subr.bf16.mxu0 0
    %779 = vmatpush2.bf16.msra.mxu0 %v554
    %780 = vmatprep.subr.bf16.mxu0 0
    %781 = vmatpush2.bf16.msra.mxu0 %v553
    %782 = vmatprep.subr.bf16.mxu0 0
    %783 = vmatpush2.bf16.msra.mxu0 %v552
    %784 = vmatprep.mubr.bf16.mxu0 %v689
    %785 = vmatmul.mubr.bf16.gmra.mxu0 %v688
    %v786 = vpop.f32.mrf.mxu0
    %v787 = vadd.f32 0.0, %v786
    %v788 = vpop.f32.mrf.mxu0
    %v789 = vpop.f32.mrf.mxu0
    %v790 = vadd.f32 0.0, %v789
    %v791 = vpop.f32.mrf.mxu0
    %792 = vmatprep.mubr.bf16.mxu0 %v691
    %793 = vmatmul.mubr.bf16.gmra.mxu0 %v690
    %v794 = vpop.f32.mrf.mxu0
    %v795 = vadd.f32 0.0, %v794
    %v796 = vpop.f32.mrf.mxu0
    %v797 = vpop.f32.mrf.mxu0
    %v798 = vadd.f32 0.0, %v797
    %v799 = vpop.f32.mrf.mxu0
    %800 = vmatprep.mubr.bf16.mxu0 %v693
    %801 = vmatmul.mubr.bf16.gmra.mxu0 %v692
    %v802 = vpop.f32.mrf.mxu0
    %v803 = vadd.f32 0.0, %v802
    %v804 = vpop.f32.mrf.mxu0
    %v805 = vpop.f32.mrf.mxu0
    %v806 = vadd.f32 0.0, %v805
    %v807 = vpop.f32.mrf.mxu0
    %808 = vmatprep.mubr.bf16.mxu0 %v695
    %809 = vmatmul.mubr.bf16.gmra.mxu0 %v694
    %v810 = vpop.f32.mrf.mxu0
    %v811 = vadd.f32 0.0, %v810
    %v812 = vpop.f32.mrf.mxu0
    %v813 = vpop.f32.mrf.mxu0
    %v814 = vadd.f32 0.0, %v813
    %v815 = vpop.f32.mrf.mxu0
    %816 = vmatprep.mubr.bf16.mxu0 %v697
    %817 = vmatmul.mubr.bf16.gmra.mxu0 %v696
    %v818 = vpop.f32.mrf.mxu0
    %v819 = vadd.f32 0.0, %v818
    %v820 = vpop.f32.mrf.mxu0
    %v821 = vpop.f32.mrf.mxu0
    %v822 = vadd.f32 0.0, %v821
    %v823 = vpop.f32.mrf.mxu0
    %824 = vmatprep.mubr.bf16.mxu0 %v699
    %825 = vmatmul.mubr.bf16.gmra.mxu0 %v698
    %v826 = vpop.f32.mrf.mxu0
    %v827 = vadd.f32 0.0, %v826
    %v828 = vpop.f32.mrf.mxu0
    %v829 = vpop.f32.mrf.mxu0
    %v830 = vadd.f32 0.0, %v829
    %v831 = vpop.f32.mrf.mxu0
    %832 = vmatprep.mubr.bf16.mxu0 %v701
    %833 = vmatmul.mubr.bf16.gmra.mxu0 %v700
    %v834 = vpop.f32.mrf.mxu0
    %v835 = vadd.f32 0.0, %v834
    %v836 = vpop.f32.mrf.mxu0
    %v837 = vpop.f32.mrf.mxu0
    %v838 = vadd.f32 0.0, %v837
    %v839 = vpop.f32.mrf.mxu0
    %840 = vmatprep.mubr.bf16.mxu0 %v703
    %841 = vmatmul.mubr.bf16.gmra.mxu0 %v702
    %v842 = vpop.f32.mrf.mxu0
    %v843 = vadd.f32 0.0, %v842
    %v844 = vpop.f32.mrf.mxu0
    %v845 = vpop.f32.mrf.mxu0
    %v846 = vadd.f32 0.0, %v845
    %v847 = vpop.f32.mrf.mxu0
    %848 = vmatprep.mubr.bf16.mxu0 %v705
    %849 = vmatmul.mubr.bf16.gmra.mxu0 %v704
    %v850 = vpop.f32.mrf.mxu0
    %v851 = vadd.f32 0.0, %v850
    %v852 = vpop.f32.mrf.mxu0
    %v853 = vpop.f32.mrf.mxu0
    %v854 = vadd.f32 0.0, %v853
    %v855 = vpop.f32.mrf.mxu0
    %856 = vmatprep.mubr.bf16.mxu0 %v707
    %857 = vmatmul.mubr.bf16.gmra.mxu0 %v706
    %v858 = vpop.f32.mrf.mxu0
    %v859 = vadd.f32 0.0, %v858
    %v860 = vpop.f32.mrf.mxu0
    %v861 = vpop.f32.mrf.mxu0
    %v862 = vadd.f32 0.0, %v861
    %v863 = vpop.f32.mrf.mxu0
    %864 = vmatprep.mubr.bf16.mxu0 %v709
    %865 = vmatmul.mubr.bf16.gmra.mxu0 %v708
    %v866 = vpop.f32.mrf.mxu0
    %v867 = vadd.f32 0.0, %v866
    %v868 = vpop.f32.mrf.mxu0
    %v869 = vpop.f32.mrf.mxu0
    %v870 = vadd.f32 0.0, %v869
    %v871 = vpop.f32.mrf.mxu0
    %872 = vmatprep.mubr.bf16.mxu0 %v711
    %873 = vmatmul.mubr.bf16.gmra.mxu0 %v710
    %v874 = vpop.f32.mrf.mxu0
    %v875 = vadd.f32 0.0, %v874
    %v876 = vpop.f32.mrf.mxu0
    %v877 = vpop.f32.mrf.mxu0
    %v878 = vadd.f32 0.0, %v877
    %v879 = vpop.f32.mrf.mxu0
    %880 = vmatprep.mubr.bf16.mxu0 %v713
    %881 = vmatmul.mubr.bf16.gmra.mxu0 %v712
    %v882 = vpop.f32.mrf.mxu0
    %v883 = vadd.f32 0.0, %v882
    %v884 = vpop.f32.mrf.mxu0
    %v885 = vpop.f32.mrf.mxu0
    %v886 = vadd.f32 0.0, %v885
    %v887 = vpop.f32.mrf.mxu0
    %888 = vmatprep.mubr.bf16.mxu0 %v715
    %889 = vmatmul.mubr.bf16.gmra.mxu0 %v714
    %v890 = vpop.f32.mrf.mxu0
    %v891 = vadd.f32 0.0, %v890
    %v892 = vpop.f32.mrf.mxu0
    %v893 = vpop.f32.mrf.mxu0
    %v894 = vadd.f32 0.0, %v893
    %v895 = vpop.f32.mrf.mxu0
    %896 = vmatprep.mubr.bf16.mxu0 %v717
    %897 = vmatmul.mubr.bf16.gmra.mxu0 %v716
    %v898 = vpop.f32.mrf.mxu0
    %v899 = vadd.f32 0.0, %v898
    %v900 = vpop.f32.mrf.mxu0
    %v901 = vpop.f32.mrf.mxu0
    %v902 = vadd.f32 0.0, %v901
    %v903 = vpop.f32.mrf.mxu0
    %904 = vmatprep.mubr.bf16.mxu0 %v719
    %905 = vmatmul.mubr.bf16.gmra.mxu0 %v718
    %v906 = vpop.f32.mrf.mxu0
    %v907 = vadd.f32 0.0, %v906
    %v908 = vpop.f32.mrf.mxu0
    %v909 = vpop.f32.mrf.mxu0
    %v910 = vadd.f32 0.0, %v909
    %v911 = vpop.f32.mrf.mxu0
    %912 = vdwg.mxu0
    %v913 = vpack.c.bf16 %v790, %v787
    %v914 = vpack.c.bf16 %v798, %v795
    %v915 = vpack.c.bf16 %v806, %v803
    %v916 = vpack.c.bf16 %v814, %v811
    %v917 = vpack.c.bf16 %v822, %v819
    %v918 = vpack.c.bf16 %v830, %v827
    %v919 = vpack.c.bf16 %v838, %v835
    %v920 = vpack.c.bf16 %v846, %v843
    %v921 = vpack.c.bf16 %v854, %v851
    %v922 = vpack.c.bf16 %v862, %v859
    %v923 = vpack.c.bf16 %v870, %v867
    %v924 = vpack.c.bf16 %v878, %v875
    %v925 = vpack.c.bf16 %v886, %v883
    %v926 = vpack.c.bf16 %v894, %v891
    %v927 = vpack.c.bf16 %v902, %v899
    %v928 = vpack.c.bf16 %v910, %v907
    %v929 = vld [vmem:[%s4] sm:$0xff]
    %v930 = vld [vmem:[%s4 + $0x8] sm:$0xff]
    %v931 = vld [vmem:[%s4 + $0x10] sm:$0xff]
    %v932 = vld [vmem:[%s4 + $0x18] sm:$0xff]
    %v933 = vld [vmem:[%s4 + $0x20] sm:$0xff]
    %v934 = vld [vmem:[%s4 + $0x28] sm:$0xff]
    %v935 = vld [vmem:[%s4 + $0x30] sm:$0xff]
    %v936 = vld [vmem:[%s4 + $0x38] sm:$0xff]
    %v937 = vld [vmem:[%s4 + $0x40] sm:$0xff]
    %v938 = vld [vmem:[%s4 + $0x48] sm:$0xff]
    %v939 = vld [vmem:[%s4 + $0x50] sm:$0xff]
    %v940 = vld [vmem:[%s4 + $0x58] sm:$0xff]
    %v941 = vld [vmem:[%s4 + $0x60] sm:$0xff]
    %v942 = vld [vmem:[%s4 + $0x68] sm:$0xff]
    %v943 = vld [vmem:[%s4 + $0x70] sm:$0xff]
    %v944 = vld [vmem:[%s4 + $0x78] sm:$0xff]
    %v945 = vld [vmem:[%s4 + $0x80] sm:$0xff]
    %v946 = vld [vmem:[%s4 + $0x88] sm:$0xff]
    %v947 = vld [vmem:[%s4 + $0x90] sm:$0xff]
    %v948 = vld [vmem:[%s4 + $0x98] sm:$0xff]
    %v949 = vld [vmem:[%s4 + $0xa0] sm:$0xff]
    %v950 = vld [vmem:[%s4 + $0xa8] sm:$0xff]
    %v951 = vld [vmem:[%s4 + $0xb0] sm:$0xff]
    %v952 = vld [vmem:[%s4 + $0xb8] sm:$0xff]
    %v953 = vld [vmem:[%s4 + $0xc0] sm:$0xff]
    %v954 = vld [vmem:[%s4 + $0xc8] sm:$0xff]
    %v955 = vld [vmem:[%s4 + $0xd0] sm:$0xff]
    %v956 = vld [vmem:[%s4 + $0xd8] sm:$0xff]
    %v957 = vld [vmem:[%s4 + $0xe0] sm:$0xff]
    %v958 = vld [vmem:[%s4 + $0xe8] sm:$0xff]
    %v959 = vld [vmem:[%s4 + $0xf0] sm:$0xff]
    %v960 = vld [vmem:[%s4 + $0xf8] sm:$0xff]
    %v961 = vpack.c.bf16 %v930, %v929
    %v962 = vpack.c.bf16 %v932, %v931
    %v963 = vpack.c.bf16 %v934, %v933
    %v964 = vpack.c.bf16 %v936, %v935
    %v965 = vpack.c.bf16 %v938, %v937
    %v966 = vpack.c.bf16 %v940, %v939
    %v967 = vpack.c.bf16 %v942, %v941
    %v968 = vpack.c.bf16 %v944, %v943
    %v969 = vpack.c.bf16 %v946, %v945
    %v970 = vpack.c.bf16 %v948, %v947
    %v971 = vpack.c.bf16 %v950, %v949
    %v972 = vpack.c.bf16 %v952, %v951
    %v973 = vpack.c.bf16 %v954, %v953
    %v974 = vpack.c.bf16 %v956, %v955
    %v975 = vpack.c.bf16 %v958, %v957
    %v976 = vpack.c.bf16 %v960, %v959
    %978 = vset.pattern.permute.xlu0 0
    %979 = vperm.xlu0 %978, %v961
    %v980 = vpop.permute.xlu0 %979
    %983 = vset.pattern.permute.xlu0 0
    %984 = vperm.xlu0 %983, %v962
    %v985 = vpop.permute.xlu0 %984
    %988 = vset.pattern.permute.xlu0 0
    %989 = vperm.xlu0 %988, %v963
    %v990 = vpop.permute.xlu0 %989
    %993 = vset.pattern.permute.xlu0 0
    %994 = vperm.xlu0 %993, %v964
    %v995 = vpop.permute.xlu0 %994
    %998 = vset.pattern.permute.xlu0 0
    %999 = vperm.xlu0 %998, %v965
    %v1000 = vpop.permute.xlu0 %999
    %1003 = vset.pattern.permute.xlu0 0
    %1004 = vperm.xlu0 %1003, %v966
    %v1005 = vpop.permute.xlu0 %1004
    %1008 = vset.pattern.permute.xlu0 0
    %1009 = vperm.xlu0 %1008, %v967
    %v1010 = vpop.permute.xlu0 %1009
    %1013 = vset.pattern.permute.xlu0 0
    %1014 = vperm.xlu0 %1013, %v968
    %v1015 = vpop.permute.xlu0 %1014
    %1018 = vset.pattern.permute.xlu0 0
    %1019 = vperm.xlu0 %1018, %v969
    %v1020 = vpop.permute.xlu0 %1019
    %1023 = vset.pattern.permute.xlu0 0
    %1024 = vperm.xlu0 %1023, %v970
    %v1025 = vpop.permute.xlu0 %1024
    %1028 = vset.pattern.permute.xlu0 0
    %1029 = vperm.xlu0 %1028, %v971
    %v1030 = vpop.permute.xlu0 %1029
    %1033 = vset.pattern.permute.xlu0 0
    %1034 = vperm.xlu0 %1033, %v972
    %v1035 = vpop.permute.xlu0 %1034
    %1038 = vset.pattern.permute.xlu0 0
    %1039 = vperm.xlu0 %1038, %v973
    %v1040 = vpop.permute.xlu0 %1039
    %1043 = vset.pattern.permute.xlu0 0
    %1044 = vperm.xlu0 %1043, %v974
    %v1045 = vpop.permute.xlu0 %1044
    %1048 = vset.pattern.permute.xlu0 0
    %1049 = vperm.xlu0 %1048, %v975
    %v1050 = vpop.permute.xlu0 %1049
    %1053 = vset.pattern.permute.xlu0 0
    %1054 = vperm.xlu0 %1053, %v976
    %v1055 = vpop.permute.xlu0 %1054
    %v1057 = vadd.bf16 %v913, %v980
    %v1058 = vadd.bf16 %v914, %v985
    %v1059 = vadd.bf16 %v915, %v990
    %v1060 = vadd.bf16 %v916, %v995
    %v1061 = vadd.bf16 %v917, %v1000
    %v1062 = vadd.bf16 %v918, %v1005
    %v1063 = vadd.bf16 %v919, %v1010
    %v1064 = vadd.bf16 %v920, %v1015
    %v1065 = vadd.bf16 %v921, %v1020
    %v1066 = vadd.bf16 %v922, %v1025
    %v1067 = vadd.bf16 %v923, %v1030
    %v1068 = vadd.bf16 %v924, %v1035
    %v1069 = vadd.bf16 %v925, %v1040
    %v1070 = vadd.bf16 %v926, %v1045
    %v1071 = vadd.bf16 %v927, %v1050
    %v1072 = vadd.bf16 %v928, %v1055
    %v1073 = vmax.bf16 %v1057, 0
    %v1074 = vmax.bf16 %v1058, 0
    %v1075 = vmax.bf16 %v1059, 0
    %v1076 = vmax.bf16 %v1060, 0
    %v1077 = vmax.bf16 %v1061, 0
    %v1078 = vmax.bf16 %v1062, 0
    %v1079 = vmax.bf16 %v1063, 0
    %v1080 = vmax.bf16 %v1064, 0
    %v1081 = vmax.bf16 %v1065, 0
    %v1082 = vmax.bf16 %v1066, 0
    %v1083 = vmax.bf16 %v1067, 0
    %v1084 = vmax.bf16 %v1068, 0
    %v1085 = vmax.bf16 %v1069, 0
    %v1086 = vmax.bf16 %v1070, 0
    %v1087 = vmax.bf16 %v1071, 0
    %v1088 = vmax.bf16 %v1072, 0
    %v1089 = vld [vmem:[%s5] sm:$0x3]
    %v1091 = vlaneseq
    %v1092 = vshrl.u32 %v1091, 7
    %v1093 = vsub.s32 0, %v1092
    %v1094 = vrot.slane %v1089, %v1093
    %v1095 = vlaneseq
    %v1096 = vshrl.u32 %v1095, 7
    %v1097 = vsub.s32 1, %v1096
    %v1098 = vrot.slane %v1089, %v1097
    %v1101 = vpack.c.bf16 %v1094, %v1094
    %v1102 = vpack.c.bf16 %v1098, %v1098
    %s1103 = sld [smem:[#allocation2]]
    %v1104 = vstv %s1103
    %1105 = vmatprep.subr.bf16.mxu0 0
    %1106 = vmatpush1.bf16.msra.mxu0 %v1080
    %1107 = vmatprep.subr.bf16.mxu0 0
    %1108 = vmatpush1.bf16.msra.mxu0 %v1079
    %1109 = vmatprep.subr.bf16.mxu0 0
    %1110 = vmatpush1.bf16.msra.mxu0 %v1078
    %1111 = vmatprep.subr.bf16.mxu0 0
    %1112 = vmatpush1.bf16.msra.mxu0 %v1077
    %1113 = vmatprep.subr.bf16.mxu0 0
    %1114 = vmatpush1.bf16.msra.mxu0 %v1076
    %1115 = vmatprep.subr.bf16.mxu0 0
    %1116 = vmatpush1.bf16.msra.mxu0 %v1075
    %1117 = vmatprep.subr.bf16.mxu0 0
    %1118 = vmatpush1.bf16.msra.mxu0 %v1074
    %1119 = vmatprep.subr.bf16.mxu0 0
    %1120 = vmatpush1.bf16.msra.mxu0 %v1073
    %1121 = vmatprep.subr.bf16.mxu0 0
    %1122 = vmatpush2.bf16.msra.mxu0 %v1088
    %1123 = vmatprep.subr.bf16.mxu0 0
    %1124 = vmatpush2.bf16.msra.mxu0 %v1087
    %1125 = vmatprep.subr.bf16.mxu0 0
    %1126 = vmatpush2.bf16.msra.mxu0 %v1086
    %1127 = vmatprep.subr.bf16.mxu0 0
    %1128 = vmatpush2.bf16.msra.mxu0 %v1085
    %1129 = vmatprep.subr.bf16.mxu0 0
    %1130 = vmatpush2.bf16.msra.mxu0 %v1084
    %1131 = vmatprep.subr.bf16.mxu0 0
    %1132 = vmatpush2.bf16.msra.mxu0 %v1083
    %1133 = vmatprep.subr.bf16.mxu0 0
    %1134 = vmatpush2.bf16.msra.mxu0 %v1082
    %1135 = vmatprep.subr.bf16.mxu0 0
    %1136 = vmatpush2.bf16.msra.mxu0 %v1081
    %1137 = vmatprep.mubr.bf16.mxu0 %v1102
    %1138 = vmatmul.mubr.bf16.gmra.mxu0 %v1101
    %v1139 = vpop.f32.mrf.mxu0
    %v1140 = vadd.f32 %v1104, %v1139
    %v1141 = vpop.f32.mrf.mxu0
    %v1142 = vpop.f32.mrf.mxu0
    %v1143 = vpop.f32.mrf.mxu0
    %1144 = vdwg.mxu0
    %1145 = vst [vmem:[#allocation3] sm:$0x1] %v1140
    // Predicated region
    $region30: #{tpu_custom_call.1} parent=1 // pred_check
      _
    $region31: #{tpu_custom_call.1} parent=1 // pred_check_branch
      %1147 = sbr.rel (0) target = $region33
    $region32: #{tpu_custom_call.1} parent=1 // pred_region
      %s1149 = ssub.s32 16, 16
      %1150 = vsyncadd [#allocation4], %s1149
      %s1152 = sshll.u32 [#allocation3], 4
      %s1153 = int_to_ptr.vmem [resolvable:$true] %s1152
      %1155 = dma.vmem_to_hbm [thread:$0]  %s1153, 16, %s7, [#allocation4]
    $region33: #{tpu_custom_call.1} parent=1 // pred_fallthru
      _
    // Predicated region
    $region34: #{tpu_custom_call.1} parent=1 // pred_check
      _
    $region35: #{tpu_custom_call.1} parent=1 // pred_check_branch
      %1157 = sbr.rel (0) target = $region37
    $region36: #{tpu_custom_call.1} parent=1 // pred_region
      %1158 = dma.done [#allocation4], 16
    $region37: #{tpu_custom_call.1} parent=1 // pred_fallthru
      _
    %1159 = vsyncpa [#allocation4], 1

</llo_original>
